<compile_context>
chip_gen: v6e
topology: v6e:2x2x1
jax: 0.10.0
libtpu: 0.0.40
codegen_flags: <defaults>
</compile_context>

<pallas_src>
import jax
import jax.numpy as jnp
from jax.experimental import pallas as pl
from jax.experimental.pallas import tpu as pltpu


def _round_up(x, m):
    return ((x + m - 1) // m) * m


# ----------------------------------------------------------------------------
# Kernel: one batch-tile of the 3-layer MLP. All feature dims padded to P=128.
# ----------------------------------------------------------------------------
def _mlp_kernel(x_ref, w1_ref, w23_ref, b_ref, out_ref):
    x = x_ref[...]                                                  # [TB, D]

    # layer1 -> ReLU   (dropout == identity in inference)
    h = jnp.dot(x, w1_ref[...], preferred_element_type=jnp.float32) + b_ref[0:1, :]
    h = jnp.maximum(h, 0.0)

    # layer2 -> ReLU
    h = jnp.dot(h, w23_ref[0, :, :], preferred_element_type=jnp.float32) + b_ref[1:2, :]
    h = jnp.maximum(h, 0.0)

    # layer3 (lane-dense padded store; wrapper slices true out_features)
    out_ref[...] = (jnp.dot(h, w23_ref[1, :, :], preferred_element_type=jnp.float32)
                    + b_ref[2:3, :]).astype(out_ref.dtype)

    # TODO(synk): training-mode nn.Dropout (stochastic masking) not implemented;
    # inference forward treats dropout as identity.


# ----------------------------------------------------------------------------
# One-time packing: pad feature dims to P = 128-multiple, stack W2/W3 & biases.
# ----------------------------------------------------------------------------
def pack_params(p):
    D, H = p["w1"].shape
    A = p["w3"].shape[1]
    P = max(_round_up(H, 128), _round_up(A, 128))

    def pad2(w, rows, cols):
        return jnp.pad(w, ((0, rows - w.shape[0]), (0, cols - w.shape[1])))

    w1p = pad2(p["w1"], D, P)                         # [D, P]
    w2p = pad2(p["w2"], P, P)                         # [P, P]
    w3p = pad2(p["w3"], P, P)                         # [P, P]
    w23 = jnp.stack([w2p, w3p], axis=0)               # [2, P, P]

    def pad1(b):
        return jnp.pad(b, (0, P - b.shape[0]))

    b = jnp.stack([pad1(p["b1"]), pad1(p["b2"]), pad1(p["b3"])], axis=0)  # [3, P]
    return {"w1": w1p, "w23": w23, "b": b}


# ----------------------------------------------------------------------------
# Wrapper
# ----------------------------------------------------------------------------
def network_forward(x, packed, out_features):
    B, D = x.shape
    P = packed["w1"].shape[1]

    # batch tiling (sublane-aligned); parallel axis -> 2 TCs on v7x at large B
    TB = 256 if B >= 256 else _round_up(B, 8)
    Bp = _round_up(B, TB)
    if Bp != B:
        x = jnp.pad(x, ((0, Bp - B), (0, 0)))
    nb = Bp // TB

    flops = 2 * Bp * (D * P + 2 * P * P)
    bytes_accessed = 4 * (Bp * D + D * P + 2 * P * P + 3 * P + Bp * P)

    out = pl.pallas_call(
        _mlp_kernel,
        out_shape=jax.ShapeDtypeStruct((Bp, P), jnp.float32),
        grid=(nb,),
        in_specs=[
            pl.BlockSpec((TB, D), lambda i: (i, 0)),        # x tile
            pl.BlockSpec((D, P), lambda i: (0, 0)),         # W1 (resident)
            pl.BlockSpec((2, P, P), lambda i: (0, 0, 0)),   # W2|W3 stacked
            pl.BlockSpec((3, P), lambda i: (0, 0)),         # biases stacked
        ],
        out_specs=pl.BlockSpec((TB, P), lambda i: (i, 0)),  # lane-dense slab
        compiler_params=pltpu.CompilerParams(
            dimension_semantics=("parallel",)),
        cost_estimate=pl.CostEstimate(
            flops=flops, transcendentals=0, bytes_accessed=bytes_accessed),
    )(x, packed["w1"], packed["w23"], packed["b"])

    return out[:B, :out_features]


# ----------------------------------------------------------------------------
# Params (Xavier-uniform weights, zero biases) + pure-JAX reference
# ----------------------------------------------------------------------------
def init_params(key, in_features, hidden, out_features):
    ks = jax.random.split(key, 3)

    def xavier(k, fan_in, fan_out):
        bound = jnp.sqrt(6.0 / (fan_in + fan_out))
        return jax.random.uniform(k, (fan_in, fan_out), jnp.float32, -bound, bound)

    return {
        "w1": xavier(ks[0], in_features, hidden),
        "b1": jnp.zeros((hidden,), jnp.float32),
        "w2": xavier(ks[1], hidden, hidden),
        "b2": jnp.zeros((hidden,), jnp.float32),
        "w3": xavier(ks[2], hidden, out_features),
        "b3": jnp.zeros((out_features,), jnp.float32),
    }


def reference_forward(x, p):
    h = jnp.maximum(x @ p["w1"] + p["b1"], 0.0)
    h = jnp.maximum(h @ p["w2"] + p["b2"], 0.0)
    return h @ p["w3"] + p["b3"]


if __name__ == "__main__":
    key = jax.random.PRNGKey(0)
    k_x, k_p = jax.random.split(key)

    B, IN, HID, OUT = 8, 32, 32, 4

    x = jax.random.normal(k_x, (B, IN), jnp.float32)
    params = init_params(k_p, IN, HID, OUT)
    packed = pack_params(params)          # one-time padding / packing

    y = network_forward(x, packed, OUT)
    jax.block_until_ready(y)

    y_ref = reference_forward(x, params)
    assert y.shape == (B, OUT)
    assert jnp.allclose(y, y_ref, atol=1e-5, rtol=1e-5)

    print("KERNEL_OK")
</pallas_src>

<mosaic_0001>
module attributes {stable_mosaic.version = 11 : i64} {
  func.func @_mlp_kernel(%arg0: i32, %arg1: memref<8x32xf32, #tpu.memory_space<vmem>>, %arg2: memref<32x128xf32, #tpu.memory_space<vmem>>, %arg3: memref<2x128x128xf32, #tpu.memory_space<vmem>>, %arg4: memref<3x128xf32, #tpu.memory_space<vmem>>, %arg5: memref<8x128xf32, #tpu.memory_space<vmem>>) attributes {dimension_semantics = [#tpu.dimension_semantics<parallel>], iteration_bounds = array<i64: 1>, scalar_prefetch = 0 : i64, scratch_operands = 0 : i64, tpu.core_type = #tpu.core_type<tc>, window_params = [{transform_indices = @transform_0, window_bounds = array<i64: 8, 32>}, {pipeline_mode = #tpu.pipeline_mode<synchronous>, transform_indices = @transform_1, window_bounds = array<i64: 32, 128>}, {pipeline_mode = #tpu.pipeline_mode<synchronous>, transform_indices = @transform_2, window_bounds = array<i64: 2, 128, 128>}, {pipeline_mode = #tpu.pipeline_mode<synchronous>, transform_indices = @transform_3, window_bounds = array<i64: 3, 128>}, {transform_indices = @transform_4, window_bounds = array<i64: 8, 128>}]} {
    %c0 = arith.constant 0 : index
    %c0_0 = arith.constant 0 : index
    %0 = vector.load %arg1[%c0, %c0_0] : memref<8x32xf32, #tpu.memory_space<vmem>>, vector<8x32xf32>
    %c0_1 = arith.constant 0 : index
    %c0_2 = arith.constant 0 : index
    %1 = vector.load %arg2[%c0_1, %c0_2] : memref<32x128xf32, #tpu.memory_space<vmem>>, vector<32x128xf32>
    %cst = arith.constant dense<0.000000e+00> : vector<8x128xf32>
    %2 = tpu.matmul %0, %1, %cst {dimension_numbers = #tpu.dot_dimension_numbers<[1], [0], [0], [1], [0, 0, 1, 1], [], []>} : vector<8x32xf32>, vector<32x128xf32>, vector<8x128xf32> -> vector<8x128xf32>
    %c0_3 = arith.constant 0 : index
    %c0_4 = arith.constant 0 : index
    %3 = vector.load %arg4[%c0_3, %c0_4] : memref<3x128xf32, #tpu.memory_space<vmem>>, vector<1x128xf32>
    %4 = vector.broadcast %3 : vector<1x128xf32> to vector<8x128xf32>
    %5 = arith.addf %2, %4 : vector<8x128xf32>
    %cst_5 = arith.constant 0.000000e+00 : f32
    %6 = vector.broadcast %cst_5 : f32 to vector<8x128xf32>
    %7 = arith.maximumf %5, %6 : vector<8x128xf32>
    %c0_6 = arith.constant 0 : index
    %c0_7 = arith.constant 0 : index
    %c0_8 = arith.constant 0 : index
    %8 = vector.load %arg3[%c0_6, %c0_7, %c0_8] : memref<2x128x128xf32, #tpu.memory_space<vmem>>, vector<1x128x128xf32>
    %9 = vector.shape_cast %8 : vector<1x128x128xf32> to vector<128x128xf32>
    %cst_9 = arith.constant dense<0.000000e+00> : vector<8x128xf32>
    %10 = tpu.matmul %7, %9, %cst_9 {dimension_numbers = #tpu.dot_dimension_numbers<[1], [0], [0], [1], [0, 0, 1, 1], [], []>} : vector<8x128xf32>, vector<128x128xf32>, vector<8x128xf32> -> vector<8x128xf32>
    %c1 = arith.constant 1 : index
    %c0_10 = arith.constant 0 : index
    %11 = vector.load %arg4[%c1, %c0_10] : memref<3x128xf32, #tpu.memory_space<vmem>>, vector<1x128xf32>
    %12 = vector.broadcast %11 : vector<1x128xf32> to vector<8x128xf32>
    %13 = arith.addf %10, %12 : vector<8x128xf32>
    %cst_11 = arith.constant 0.000000e+00 : f32
    %14 = vector.broadcast %cst_11 : f32 to vector<8x128xf32>
    %15 = arith.maximumf %13, %14 : vector<8x128xf32>
    %c1_12 = arith.constant 1 : index
    %c0_13 = arith.constant 0 : index
    %c0_14 = arith.constant 0 : index
    %16 = vector.load %arg3[%c1_12, %c0_13, %c0_14] : memref<2x128x128xf32, #tpu.memory_space<vmem>>, vector<1x128x128xf32>
    %17 = vector.shape_cast %16 : vector<1x128x128xf32> to vector<128x128xf32>
    %cst_15 = arith.constant dense<0.000000e+00> : vector<8x128xf32>
    %18 = tpu.matmul %15, %17, %cst_15 {dimension_numbers = #tpu.dot_dimension_numbers<[1], [0], [0], [1], [0, 0, 1, 1], [], []>} : vector<8x128xf32>, vector<128x128xf32>, vector<8x128xf32> -> vector<8x128xf32>
    %c2 = arith.constant 2 : index
    %c0_16 = arith.constant 0 : index
    %19 = vector.load %arg4[%c2, %c0_16] : memref<3x128xf32, #tpu.memory_space<vmem>>, vector<1x128xf32>
    %20 = vector.broadcast %19 : vector<1x128xf32> to vector<8x128xf32>
    %21 = arith.addf %18, %20 : vector<8x128xf32>
    %c0_17 = arith.constant 0 : index
    %c0_18 = arith.constant 0 : index
    %22 = vector.load %arg5[%c0_17, %c0_18] : memref<8x128xf32, #tpu.memory_space<vmem>>, vector<8x128xf32>
    tpu.vector_store %arg5[%c0_17, %c0_18], %21 {strides = array<i32>} : memref<8x128xf32, #tpu.memory_space<vmem>>, vector<8x128xf32>,
    return
  }
  func.func @transform_0(%arg0: i32) -> (i32, i32) {
    %c0_i32 = arith.constant 0 : i32
    %c0_i32_0 = arith.constant 0 : i32
    return %arg0, %c0_i32 : i32, i32
  }
  func.func @transform_1(%arg0: i32) -> (i32, i32) {
    %c0_i32 = arith.constant 0 : i32
    %c0_i32_0 = arith.constant 0 : i32
    %c0_i32_1 = arith.constant 0 : i32
    return %c0_i32, %c0_i32_0 : i32, i32
  }
  func.func @transform_2(%arg0: i32) -> (i32, i32, i32) {
    %c0_i32 = arith.constant 0 : i32
    %c0_i32_0 = arith.constant 0 : i32
    %c0_i32_1 = arith.constant 0 : i32
    %c0_i32_2 = arith.constant 0 : i32
    return %c0_i32, %c0_i32_0, %c0_i32_1 : i32, i32, i32
  }
  func.func @transform_3(%arg0: i32) -> (i32, i32) {
    %c0_i32 = arith.constant 0 : i32
    %c0_i32_0 = arith.constant 0 : i32
    %c0_i32_1 = arith.constant 0 : i32
    return %c0_i32, %c0_i32_0 : i32, i32
  }
  func.func @transform_4(%arg0: i32) -> (i32, i32) {
    %c0_i32 = arith.constant 0 : i32
    %c0_i32_0 = arith.constant 0 : i32
    return %arg0, %c0_i32 : i32, i32
  }
}

</mosaic_0001>

<llo_original>
// kernel: tpu_custom_call.1
$region0: #{tpu_custom_call.1}
  #allocation0 [shape = 'u32[]', space=smem, size = 0x4, offset = 0x4, fixed_abs, tag = 'smem constant byte address 0x4 - core index']
  #allocation1 [shape = 'u32[144,128]{1,0:T(1,128)}', space=vmem, size = 0x12000, scoped, tag = 'internal scratch']
  %s0 = inlined_call_operand.hbm [shape: f32[8,32], index: 0, kind: input, shape index: {}]
  %s1 = inlined_call_operand.hbm [shape: f32[32,128], index: 1, kind: input, shape index: {}]
  %s2 = inlined_call_operand.hbm [shape: f32[2,128,128], index: 2, kind: input, shape index: {}]
  %s3 = inlined_call_operand.vmem [shape: f32[3,128], index: 3, kind: input, shape index: {}]
  %s4 = inlined_call_operand.hbm [shape: f32[8,128], index: 4, kind: output, shape index: {}]
  %s5 = sld [smem:[#allocation0]]
  $region38: #{tpu_custom_call.1} parent=0
    _
  %s7 = ssub.s32 1, %s5
  %s8 = scalar_select 0, %s7, %s5
  $region1: #{tpu_custom_call.1} parent=0
    #allocation2 [shape = 'u8[4096]{0}', space=vmem, size = 0x1000, scoped, tag = 'input window, operand 0, single buffered']
    #allocation3 [shape = 's32[1]{0}', space=sflag, size = 0x4, scoped, tag = 'scoped memory for tpu_custom_call.1']
    #allocation4 [shape = 's32[1]{0}', space=sflag, size = 0x4, scoped, tag = 'scoped memory for tpu_custom_call.1']
    #allocation5 [shape = 'u8[16384]{0}', space=vmem, size = 0x4000, scoped, tag = 'input window, operand 1, single buffered']
    #allocation6 [shape = 's32[1]{0}', space=sflag, size = 0x4, scoped, tag = 'scoped memory for tpu_custom_call.1']
    #allocation7 [shape = 'u8[131072]{0}', space=vmem, size = 0x20000, scoped, tag = 'input window, operand 2, single buffered']
    #allocation8 [shape = 'u8[4096]{0}', space=vmem, size = 0x1000, scoped, tag = 'output window, operand 0, single buffered']
    %9 = vsyncpa [#allocation3], 0
    %10 = vsyncpa [#allocation6], 0
    %11 = vsyncpa [#allocation4], 0
    // Predicated region
    $region2: #{tpu_custom_call.1} parent=1 // pred_check
      _
    $region3: #{tpu_custom_call.1} parent=1 // pred_check_branch
      %13 = sbr.rel (0) target = $region5
    $region4: #{tpu_custom_call.1} parent=1 // pred_region
      %s15 = ssub.s32 128, 128
      %16 = vsyncadd [#allocation3], %s15
      %s18 = sshll.u32 [#allocation2], 4
      %s19 = int_to_ptr.vmem [resolvable:$true] %s18
      %21 = dma.hbm_to_vmem [thread:$0]  %s0, 128, %s19, [#allocation3]
    $region5: #{tpu_custom_call.1} parent=1 // pred_fallthru
      _
    // Predicated region
    $region6: #{tpu_custom_call.1} parent=1 // pred_check
      _
    $region7: #{tpu_custom_call.1} parent=1 // pred_check_branch
      %23 = sbr.rel (0) target = $region9
    $region8: #{tpu_custom_call.1} parent=1 // pred_region
      %s25 = ssub.s32 512, 512
      %26 = vsyncadd [#allocation6], %s25
      %s27 = sshll.u32 [#allocation5], 4
      %s28 = int_to_ptr.vmem [resolvable:$true] %s27
      %33 = dma.hbm_to_vmem [thread:$0]  %s1, 512, %s28, [#allocation6], 128, 128, 8
    $region9: #{tpu_custom_call.1} parent=1 // pred_fallthru
      _
    // Predicated region
    $region10: #{tpu_custom_call.1} parent=1 // pred_check
      _
    $region11: #{tpu_custom_call.1} parent=1 // pred_check_branch
      %35 = sbr.rel (0) target = $region13
    $region12: #{tpu_custom_call.1} parent=1 // pred_region
      %s37 = ssub.s32 4096, 4096
      %38 = vsyncadd [#allocation6], %s37
      %s39 = sshll.u32 [#allocation7], 4
      %s40 = int_to_ptr.vmem [resolvable:$true] %s39
      %45 = dma.hbm_to_vmem [thread:$0]  %s2, 4096, %s40, [#allocation6], 128, 128, 8
    $region13: #{tpu_custom_call.1} parent=1 // pred_fallthru
      _
    // Predicated region
    $region14: #{tpu_custom_call.1} parent=1 // pred_check
      _
    $region15: #{tpu_custom_call.1} parent=1 // pred_check_branch
      %47 = sbr.rel (0) target = $region17
    $region16: #{tpu_custom_call.1} parent=1 // pred_region
      _
    $region17: #{tpu_custom_call.1} parent=1 // pred_fallthru
      _
    // Predicated region
    $region18: #{tpu_custom_call.1} parent=1 // pred_check
      _
    $region19: #{tpu_custom_call.1} parent=1 // pred_check_branch
      %49 = sbr.rel (0) target = $region21
    $region20: #{tpu_custom_call.1} parent=1 // pred_region
      %50 = dma.done [#allocation3], 128
    $region21: #{tpu_custom_call.1} parent=1 // pred_fallthru
      _
    // Predicated region
    $region22: #{tpu_custom_call.1} parent=1 // pred_check
      _
    $region23: #{tpu_custom_call.1} parent=1 // pred_check_branch
      %52 = sbr.rel (0) target = $region25
    $region24: #{tpu_custom_call.1} parent=1 // pred_region
      %53 = dma.done [#allocation6], 512
    $region25: #{tpu_custom_call.1} parent=1 // pred_fallthru
      _
    // Predicated region
    $region26: #{tpu_custom_call.1} parent=1 // pred_check
      _
    $region27: #{tpu_custom_call.1} parent=1 // pred_check_branch
      %55 = sbr.rel (0) target = $region29
    $region28: #{tpu_custom_call.1} parent=1 // pred_region
      %56 = dma.done [#allocation6], 4096
    $region29: #{tpu_custom_call.1} parent=1 // pred_fallthru
      _
    %v57 = vld [vmem:[#allocation2] sm:$0xff]
    %v58 = vld [vmem:[#allocation5] sm:$0xff]
    %v59 = vld [vmem:[#allocation5 + $0x8] sm:$0xff]
    %v60 = vld [vmem:[#allocation5 + $0x10] sm:$0xff]
    %v61 = vld [vmem:[#allocation5 + $0x18] sm:$0xff]
    %v62 = vld [vmem:[%s3] sm:$0x1]
    %v63 = vlaneseq
    %v64 = vshrl.u32 %v63, 7
    %v65 = vsub.s32 0, %v64
    %v66 = vrot.slane %v62, %v65
    %vm67 = vcmask 261120
    %v69 = vsel %vm67, %v57, 0
    %71 = vmatprep.subr.mxu0 0.0
    %72 = vmatpush1.msra.mxu0 0.0
    %73 = vmatprep.subr.mxu0 0.0
    %74 = vmatpush1.msra.mxu0 0.0
    %75 = vmatprep.subr.mxu0 0.0
    %76 = vmatpush1.msra.mxu0 0.0
    %77 = vmatprep.subr.mxu0 0.0
    %78 = vmatpush1.msra.mxu0 0.0
    %79 = vmatprep.subr.mxu0 0.0
    %80 = vmatpush1.msra.mxu0 0.0
    %81 = vmatprep.subr.mxu0 0.0
    %82 = vmatpush1.msra.mxu0 0.0
    %83 = vmatprep.subr.mxu0 0.0
    %84 = vmatpush1.msra.mxu0 0.0
    %85 = vmatprep.subr.mxu0 0.0
    %86 = vmatpush1.msra.mxu0 0.0
    %87 = vmatprep.subr.mxu0 0.0
    %88 = vmatpush1.msra.mxu0 0.0
    %89 = vmatprep.subr.mxu0 0.0
    %90 = vmatpush1.msra.mxu0 0.0
    %91 = vmatprep.subr.mxu0 0.0
    %92 = vmatpush1.msra.mxu0 0.0
    %93 = vmatprep.subr.mxu0 0.0
    %94 = vmatpush1.msra.mxu0 0.0
    %95 = vmatprep.subr.mxu0 0.0
    %96 = vmatpush1.msra.mxu0 %v61
    %97 = vmatprep.subr.mxu0 0.0
    %98 = vmatpush1.msra.mxu0 %v60
    %99 = vmatprep.subr.mxu0 0.0
    %100 = vmatpush1.msra.mxu0 %v59
    %101 = vmatprep.subr.mxu0 0.0
    %102 = vmatpush1.msra.mxu0 %v58
    %103 = vmatprep.subr.mxu0 0.0
    %104 = vmatpush2.msra.mxu0 0.0
    %105 = vmatprep.subr.mxu0 0.0
    %106 = vmatpush2.msra.mxu0 0.0
    %107 = vmatprep.subr.mxu0 0.0
    %108 = vmatpush2.msra.mxu0 0.0
    %109 = vmatprep.subr.mxu0 0.0
    %110 = vmatpush2.msra.mxu0 0.0
    %111 = vmatprep.subr.mxu0 0.0
    %112 = vmatpush2.msra.mxu0 0.0
    %113 = vmatprep.subr.mxu0 0.0
    %114 = vmatpush2.msra.mxu0 0.0
    %115 = vmatprep.subr.mxu0 0.0
    %116 = vmatpush2.msra.mxu0 0.0
    %117 = vmatprep.subr.mxu0 0.0
    %118 = vmatpush2.msra.mxu0 0.0
    %119 = vmatprep.subr.mxu0 0.0
    %120 = vmatpush2.msra.mxu0 0.0
    %121 = vmatprep.subr.mxu0 0.0
    %122 = vmatpush2.msra.mxu0 0.0
    %123 = vmatprep.subr.mxu0 0.0
    %124 = vmatpush2.msra.mxu0 0.0
    %125 = vmatprep.subr.mxu0 0.0
    %126 = vmatpush2.msra.mxu0 0.0
    %127 = vmatprep.subr.mxu0 0.0
    %128 = vmatpush2.msra.mxu0 0.0
    %129 = vmatprep.subr.mxu0 0.0
    %130 = vmatpush2.msra.mxu0 0.0
    %131 = vmatprep.subr.mxu0 0.0
    %132 = vmatpush2.msra.mxu0 0.0
    %133 = vmatprep.subr.mxu0 0.0
    %134 = vmatpush2.msra.mxu0 0.0
    %135 = vmatprep.mubr.f32.mxu0 0.0
    %136 = vmatmul.mubr.f32.gmra.mxu0 %v69
    %v137 = vpop.f32.mrf.mxu0
    %v138 = vadd.f32 %v66, %v137
    %v139 = vpop.f32.mrf.mxu0
    %140 = vdwg.mxu0
    %v141 = vmax.f32 %v138, 0.0
    %v142 = vld [vmem:[#allocation7] sm:$0xff]
    %v143 = vld [vmem:[#allocation7 + $0x8] sm:$0xff]
    %v144 = vld [vmem:[#allocation7 + $0x10] sm:$0xff]
    %v145 = vld [vmem:[#allocation7 + $0x18] sm:$0xff]
    %v146 = vld [vmem:[#allocation7 + $0x20] sm:$0xff]
    %v147 = vld [vmem:[#allocation7 + $0x28] sm:$0xff]
    %v148 = vld [vmem:[#allocation7 + $0x30] sm:$0xff]
    %v149 = vld [vmem:[#allocation7 + $0x38] sm:$0xff]
    %v150 = vld [vmem:[#allocation7 + $0x40] sm:$0xff]
    %v151 = vld [vmem:[#allocation7 + $0x48] sm:$0xff]
    %v152 = vld [vmem:[#allocation7 + $0x50] sm:$0xff]
    %v153 = vld [vmem:[#allocation7 + $0x58] sm:$0xff]
    %v154 = vld [vmem:[#allocation7 + $0x60] sm:$0xff]
    %v155 = vld [vmem:[#allocation7 + $0x68] sm:$0xff]
    %v156 = vld [vmem:[#allocation7 + $0x70] sm:$0xff]
    %v157 = vld [vmem:[#allocation7 + $0x78] sm:$0xff]
    %v158 = vld [vmem:[%s3 + $0x1] sm:$0x1]
    %v159 = vlaneseq
    %v160 = vshrl.u32 %v159, 7
    %v161 = vsub.s32 0, %v160
    %v162 = vrot.slane %v158, %v161
    %163 = vmatprep.subr.mxu0 0.0
    %164 = vmatpush1.msra.mxu0 %v157
    %165 = vmatprep.subr.mxu0 0.0
    %166 = vmatpush1.msra.mxu0 %v156
    %167 = vmatprep.subr.mxu0 0.0
    %168 = vmatpush1.msra.mxu0 %v155
    %169 = vmatprep.subr.mxu0 0.0
    %170 = vmatpush1.msra.mxu0 %v154
    %171 = vmatprep.subr.mxu0 0.0
    %172 = vmatpush1.msra.mxu0 %v153
    %173 = vmatprep.subr.mxu0 0.0
    %174 = vmatpush1.msra.mxu0 %v152
    %175 = vmatprep.subr.mxu0 0.0
    %176 = vmatpush1.msra.mxu0 %v151
    %177 = vmatprep.subr.mxu0 0.0
    %178 = vmatpush1.msra.mxu0 %v150
    %179 = vmatprep.subr.mxu0 0.0
    %180 = vmatpush1.msra.mxu0 %v149
    %181 = vmatprep.subr.mxu0 0.0
    %182 = vmatpush1.msra.mxu0 %v148
    %183 = vmatprep.subr.mxu0 0.0
    %184 = vmatpush1.msra.mxu0 %v147
    %185 = vmatprep.subr.mxu0 0.0
    %186 = vmatpush1.msra.mxu0 %v146
    %187 = vmatprep.subr.mxu0 0.0
    %188 = vmatpush1.msra.mxu0 %v145
    %189 = vmatprep.subr.mxu0 0.0
    %190 = vmatpush1.msra.mxu0 %v144
    %191 = vmatprep.subr.mxu0 0.0
    %192 = vmatpush1.msra.mxu0 %v143
    %193 = vmatprep.subr.mxu0 0.0
    %194 = vmatpush1.msra.mxu0 %v142
    %195 = vmatprep.subr.mxu0 0.0
    %196 = vmatpush2.msra.mxu0 0.0
    %197 = vmatprep.subr.mxu0 0.0
    %198 = vmatpush2.msra.mxu0 0.0
    %199 = vmatprep.subr.mxu0 0.0
    %200 = vmatpush2.msra.mxu0 0.0
    %201 = vmatprep.subr.mxu0 0.0
    %202 = vmatpush2.msra.mxu0 0.0
    %203 = vmatprep.subr.mxu0 0.0
    %204 = vmatpush2.msra.mxu0 0.0
    %205 = vmatprep.subr.mxu0 0.0
    %206 = vmatpush2.msra.mxu0 0.0
    %207 = vmatprep.subr.mxu0 0.0
    %208 = vmatpush2.msra.mxu0 0.0
    %209 = vmatprep.subr.mxu0 0.0
    %210 = vmatpush2.msra.mxu0 0.0
    %211 = vmatprep.subr.mxu0 0.0
    %212 = vmatpush2.msra.mxu0 0.0
    %213 = vmatprep.subr.mxu0 0.0
    %214 = vmatpush2.msra.mxu0 0.0
    %215 = vmatprep.subr.mxu0 0.0
    %216 = vmatpush2.msra.mxu0 0.0
    %217 = vmatprep.subr.mxu0 0.0
    %218 = vmatpush2.msra.mxu0 0.0
    %219 = vmatprep.subr.mxu0 0.0
    %220 = vmatpush2.msra.mxu0 0.0
    %221 = vmatprep.subr.mxu0 0.0
    %222 = vmatpush2.msra.mxu0 0.0
    %223 = vmatprep.subr.mxu0 0.0
    %224 = vmatpush2.msra.mxu0 0.0
    %225 = vmatprep.subr.mxu0 0.0
    %226 = vmatpush2.msra.mxu0 0.0
    %227 = vmatprep.mubr.f32.mxu0 0.0
    %228 = vmatmul.mubr.f32.gmra.mxu0 %v141
    %v229 = vpop.f32.mrf.mxu0
    %v230 = vadd.f32 %v162, %v229
    %v231 = vpop.f32.mrf.mxu0
    %232 = vdwg.mxu0
    %v233 = vmax.f32 %v230, 0.0
    %s234 = scalar_lea.vmem [#allocation7], 128
    %v235 = vld [vmem:[%s234] sm:$0xff]
    %v236 = vld [vmem:[%s234 + $0x8] sm:$0xff]
    %v237 = vld [vmem:[%s234 + $0x10] sm:$0xff]
    %v238 = vld [vmem:[%s234 + $0x18] sm:$0xff]
    %v239 = vld [vmem:[%s234 + $0x20] sm:$0xff]
    %v240 = vld [vmem:[%s234 + $0x28] sm:$0xff]
    %v241 = vld [vmem:[%s234 + $0x30] sm:$0xff]
    %v242 = vld [vmem:[%s234 + $0x38] sm:$0xff]
    %v243 = vld [vmem:[%s234 + $0x40] sm:$0xff]
    %v244 = vld [vmem:[%s234 + $0x48] sm:$0xff]
    %v245 = vld [vmem:[%s234 + $0x50] sm:$0xff]
    %v246 = vld [vmem:[%s234 + $0x58] sm:$0xff]
    %v247 = vld [vmem:[%s234 + $0x60] sm:$0xff]
    %v248 = vld [vmem:[%s234 + $0x68] sm:$0xff]
    %v249 = vld [vmem:[%s234 + $0x70] sm:$0xff]
    %v250 = vld [vmem:[%s234 + $0x78] sm:$0xff]
    %v251 = vld [vmem:[%s3 + $0x2] sm:$0x1]
    %v252 = vlaneseq
    %v253 = vshrl.u32 %v252, 7
    %v254 = vsub.s32 0, %v253
    %v255 = vrot.slane %v251, %v254
    %256 = vmatprep.subr.mxu0 0.0
    %257 = vmatpush1.msra.mxu0 %v250
    %258 = vmatprep.subr.mxu0 0.0
    %259 = vmatpush1.msra.mxu0 %v249
    %260 = vmatprep.subr.mxu0 0.0
    %261 = vmatpush1.msra.mxu0 %v248
    %262 = vmatprep.subr.mxu0 0.0
    %263 = vmatpush1.msra.mxu0 %v247
    %264 = vmatprep.subr.mxu0 0.0
    %265 = vmatpush1.msra.mxu0 %v246
    %266 = vmatprep.subr.mxu0 0.0
    %267 = vmatpush1.msra.mxu0 %v245
    %268 = vmatprep.subr.mxu0 0.0
    %269 = vmatpush1.msra.mxu0 %v244
    %270 = vmatprep.subr.mxu0 0.0
    %271 = vmatpush1.msra.mxu0 %v243
    %272 = vmatprep.subr.mxu0 0.0
    %273 = vmatpush1.msra.mxu0 %v242
    %274 = vmatprep.subr.mxu0 0.0
    %275 = vmatpush1.msra.mxu0 %v241
    %276 = vmatprep.subr.mxu0 0.0
    %277 = vmatpush1.msra.mxu0 %v240
    %278 = vmatprep.subr.mxu0 0.0
    %279 = vmatpush1.msra.mxu0 %v239
    %280 = vmatprep.subr.mxu0 0.0
    %281 = vmatpush1.msra.mxu0 %v238
    %282 = vmatprep.subr.mxu0 0.0
    %283 = vmatpush1.msra.mxu0 %v237
    %284 = vmatprep.subr.mxu0 0.0
    %285 = vmatpush1.msra.mxu0 %v236
    %286 = vmatprep.subr.mxu0 0.0
    %287 = vmatpush1.msra.mxu0 %v235
    %288 = vmatprep.subr.mxu0 0.0
    %289 = vmatpush2.msra.mxu0 0.0
    %290 = vmatprep.subr.mxu0 0.0
    %291 = vmatpush2.msra.mxu0 0.0
    %292 = vmatprep.subr.mxu0 0.0
    %293 = vmatpush2.msra.mxu0 0.0
    %294 = vmatprep.subr.mxu0 0.0
    %295 = vmatpush2.msra.mxu0 0.0
    %296 = vmatprep.subr.mxu0 0.0
    %297 = vmatpush2.msra.mxu0 0.0
    %298 = vmatprep.subr.mxu0 0.0
    %299 = vmatpush2.msra.mxu0 0.0
    %300 = vmatprep.subr.mxu0 0.0
    %301 = vmatpush2.msra.mxu0 0.0
    %302 = vmatprep.subr.mxu0 0.0
    %303 = vmatpush2.msra.mxu0 0.0
    %304 = vmatprep.subr.mxu0 0.0
    %305 = vmatpush2.msra.mxu0 0.0
    %306 = vmatprep.subr.mxu0 0.0
    %307 = vmatpush2.msra.mxu0 0.0
    %308 = vmatprep.subr.mxu0 0.0
    %309 = vmatpush2.msra.mxu0 0.0
    %310 = vmatprep.subr.mxu0 0.0
    %311 = vmatpush2.msra.mxu0 0.0
    %312 = vmatprep.subr.mxu0 0.0
    %313 = vmatpush2.msra.mxu0 0.0
    %314 = vmatprep.subr.mxu0 0.0
    %315 = vmatpush2.msra.mxu0 0.0
    %316 = vmatprep.subr.mxu0 0.0
    %317 = vmatpush2.msra.mxu0 0.0
    %318 = vmatprep.subr.mxu0 0.0
    %319 = vmatpush2.msra.mxu0 0.0
    %320 = vmatprep.mubr.f32.mxu0 0.0
    %321 = vmatmul.mubr.f32.gmra.mxu0 %v233
    %v322 = vpop.f32.mrf.mxu0
    %v323 = vadd.f32 %v255, %v322
    %v324 = vpop.f32.mrf.mxu0
    %325 = vdwg.mxu0
    %326 = vst [vmem:[#allocation8] sm:$0xff] %v323
    // Predicated region
    $region30: #{tpu_custom_call.1} parent=1 // pred_check
      _
    $region31: #{tpu_custom_call.1} parent=1 // pred_check_branch
      %328 = sbr.rel (0) target = $region33
    $region32: #{tpu_custom_call.1} parent=1 // pred_region
      %s330 = ssub.s32 128, 128
      %331 = vsyncadd [#allocation4], %s330
      %s333 = sshll.u32 [#allocation8], 4
      %s334 = int_to_ptr.vmem [resolvable:$true] %s333
      %336 = dma.vmem_to_hbm [thread:$0]  %s334, 128, %s4, [#allocation4]
    $region33: #{tpu_custom_call.1} parent=1 // pred_fallthru
      _
    // Predicated region
    $region34: #{tpu_custom_call.1} parent=1 // pred_check
      _
    $region35: #{tpu_custom_call.1} parent=1 // pred_check_branch
      %338 = sbr.rel (0) target = $region37
    $region36: #{tpu_custom_call.1} parent=1 // pred_region
      %339 = dma.done [#allocation4], 128
    $region37: #{tpu_custom_call.1} parent=1 // pred_fallthru
      _
    %340 = vsyncpa [#allocation3], 1
    %341 = vsyncpa [#allocation6], 1
    %342 = vsyncpa [#allocation4], 1

</llo_original>
